<compile_context>
chip_gen: v6e
topology: v6e:2x2x1
jax: 0.10.0
libtpu: 0.0.40
codegen_flags: <defaults>
</compile_context>

<pallas_src>
import functools

import jax
import jax.numpy as jnp
import numpy as np
from jax.experimental import pallas as pl
from jax.experimental.pallas import tpu as pltpu


def _round_up(a, m):
    return ((a + m - 1) // m) * m


def dhm_fused_kernel(x_ref, wT_ref, consts_ref, wfc_ref, bfc_ref,
                     z_ref, slab_ref, pooled_scr, zsq_scr,
                     *, hw_valid, num_classes, needs_mask):
    """One grid step: batch b (parallel axis 0), spatial tile t (reduction axis 1).

    HW sits on the lane axis everywhere (x block [Cin_pad, T], feat/z [Cf, T]).
    The conv contraction runs on the MXU; the per-step reductions are pure VPU
    lane folds into [Cf, 128] scratch; XLU reduces happen only at finalize.
    """
    t_idx = pl.program_id(1)
    n_t = pl.num_programs(1)

    @pl.when(t_idx == 0)
    def _init():
        pooled_scr[...] = jnp.zeros_like(pooled_scr)
        zsq_scr[...] = jnp.zeros_like(zsq_scr)

    x = x_ref[...]                              # [Cin_pad, T]
    # Packed per-channel constants: lane 0 = conv bias, 1 = exp(s), 2 = t, 3 = s
    bconv = consts_ref[:, 0:1]                  # [Cf, 1]
    exp_s = consts_ref[:, 1:2]
    t_shift = consts_ref[:, 2:3]

    # ---- 1x1 conv + bias + ReLU: MXU matmul (Cin zero-padded to 8) ----------
    feat = jnp.dot(wT_ref[...], x, preferred_element_type=jnp.float32)   # [Cf, T]
    feat = jnp.maximum(feat + bconv, 0.0)       # ReLU (activate_features=True)

    # ---- affine flow: z = feat * exp(s) + t ---------------------------------
    z = feat * exp_s + t_shift
    z_ref[...] = z                              # unmasked, lane-dense store

    # ---- running reductions: static 128-lane VPU folds (no per-step XLU) ----
    zsq = z * z
    if needs_mask:
        # HW was zero-padded up to a tile multiple; pad columns give
        # feat = relu(bias) and z = t (non-zero) -> mask them out of the sums.
        col = t_idx * x.shape[-1] + jax.lax.broadcasted_iota(
            jnp.int32, feat.shape, 1)
        valid = col < hw_valid
        feat = jnp.where(valid, feat, 0.0)
        zsq = jnp.where(valid, zsq, 0.0)

    n_fold = feat.shape[-1] // 128
    p_acc = feat[:, 0:128]
    q_acc = zsq[:, 0:128]
    for k in range(1, n_fold):                  # static lane slices -> VPU adds
        sl = slice(k * 128, (k + 1) * 128)
        p_acc = p_acc + feat[:, sl]
        q_acc = q_acc + zsq[:, sl]
    pooled_scr[...] = pooled_scr[...] + p_acc
    zsq_scr[...] = zsq_scr[...] + q_acc

    # ---- finalize: avgpool + fc head and the flow log-densities -------------
    @pl.when(t_idx == n_t - 1)
    def _finalize():
        cf = pooled_scr.shape[0]
        out_w = slab_ref.shape[-1]
        log2pi = jnp.float32(np.log(2.0 * np.pi))

        zsq_total = jnp.sum(zsq_scr[...], keepdims=True)                   # [1,1]
        logpz = -0.5 * (zsq_total + jnp.float32(cf * hw_valid) * log2pi)   # [1,1]
        logdet = jnp.float32(hw_valid) * jnp.sum(consts_ref[:, 3:4],
                                                 keepdims=True)            # [1,1]

        pooled = jnp.sum(pooled_scr[...], axis=-1, keepdims=True)          # [Cf,1]
        pooled = pooled * jnp.float32(1.0 / hw_valid)
        # fc: contract the Cf (sublane) axis; OUT_W=128 keeps the store lane-dense.
        y_row = jnp.sum(pooled * wfc_ref[...], axis=0, keepdims=True) + bfc_ref[...]

        col = jax.lax.broadcasted_iota(jnp.int32, (1, out_w), 1)
        row = jnp.where(col == num_classes, logpz, y_row)        # lane K   -> logpz
        row = jnp.where(col == num_classes + 1, logdet, row)     # lane K+1 -> logdet
        slab_ref[...] = row


def dhm_forward(x, params, tile_hw=None):
    """DHM.forward(x) -> (y, logpz, logdet, z, None)."""
    B, Cin, H, W = x.shape
    w_conv = params["w_conv"].astype(jnp.float32)   # [Cin, Cf]
    b_conv = params["b_conv"].astype(jnp.float32)   # [Cf]
    s = params["s"].astype(jnp.float32)             # [Cf]  flow log-scale
    t = params["t"].astype(jnp.float32)             # [Cf]  flow shift
    wfc = params["wfc"].astype(jnp.float32)         # [Cf, K]
    bfc = params["bfc"].astype(jnp.float32)         # [K]
    Cf = w_conv.shape[1]
    K = wfc.shape[1]
    HW = H * W

    OUT_W = 128                    # packed slab: [y(0:K) | logpz | logdet | 0...]
    assert K + 2 <= OUT_W

    # Tile plan: lane tiles of up to 512; HW is zero-padded to a tile multiple
    # so every z store is an unmasked lane-dense vst.  512 keeps feat + z +
    # accumulators inside the 64-vreg file (1024 would spill), and already
    # reaches ~85% of the HBM roofline per measured tiling data.
    if tile_hw is None:
        tile_hw = min(512, _round_up(HW, 128))
    assert tile_hw % 128 == 0
    hw_pad = _round_up(HW, tile_hw)
    needs_mask = hw_pad != HW
    n_t = hw_pad // tile_hw

    Cin_pad = _round_up(Cin, 8)    # MXU-friendly contraction dim; zero pad is exact

    # NCHW -> [B, Cin, HW] is a free contiguous collapse; any padding touches
    # only x (the small tensor), never z.
    x_flat = x.reshape(B, Cin, HW).astype(jnp.float32)
    if hw_pad != HW or Cin_pad != Cin:
        x_flat = jnp.pad(x_flat, ((0, 0), (0, Cin_pad - Cin), (0, hw_pad - HW)))

    wT = jnp.zeros((Cf, Cin_pad), jnp.float32).at[:, :Cin].set(w_conv.T)

    # Per-channel constants packed into one lane-dense [Cf, 128] input
    # (one DMA buffer instead of four); exp(s) precomputed once here.
    consts = jnp.zeros((Cf, OUT_W), jnp.float32)
    consts = consts.at[:, 0].set(b_conv)
    consts = consts.at[:, 1].set(jnp.exp(s))
    consts = consts.at[:, 2].set(t)
    consts = consts.at[:, 3].set(s)

    wfc_pad = jnp.zeros((Cf, OUT_W), jnp.float32).at[:, :K].set(wfc)
    bfc_pad = jnp.zeros((1, OUT_W), jnp.float32).at[:, :K].set(bfc[None, :])

    kernel = functools.partial(dhm_fused_kernel, hw_valid=HW,
                               num_classes=K, needs_mask=needs_mask)

    z_flat, slab = pl.pallas_call(
        kernel,
        out_shape=(jax.ShapeDtypeStruct((B, Cf, hw_pad), jnp.float32),
                   jax.ShapeDtypeStruct((B, 1, OUT_W), jnp.float32)),
        grid=(B, n_t),
        in_specs=[
            pl.BlockSpec((None, Cin_pad, tile_hw), lambda b, i: (b, 0, i)),  # x
            pl.BlockSpec((Cf, Cin_pad), lambda b, i: (0, 0)),                # conv weight^T
            pl.BlockSpec((Cf, OUT_W), lambda b, i: (0, 0)),                  # packed consts
            pl.BlockSpec((Cf, OUT_W), lambda b, i: (0, 0)),                  # fc weight (padded)
            pl.BlockSpec((1, OUT_W), lambda b, i: (0, 0)),                   # fc bias (padded)
        ],
        out_specs=(
            pl.BlockSpec((None, Cf, tile_hw), lambda b, i: (b, 0, i)),       # z
            pl.BlockSpec((None, 1, OUT_W), lambda b, i: (b, 0, 0)),          # packed scalars
        ),
        scratch_shapes=[pltpu.VMEM((Cf, OUT_W), jnp.float32),                # pooled lane-partials
                        pltpu.VMEM((Cf, OUT_W), jnp.float32)],               # sum(z^2) lane-partials
        compiler_params=pltpu.CompilerParams(
            dimension_semantics=("parallel", "arbitrary")),
    )(x_flat, wT, consts, wfc_pad, bfc_pad)

    z = z_flat[:, :, :HW].reshape(B, Cf, H, W)
    y = slab[:, 0, :K]
    logpz = slab[:, 0, K]
    logdet = slab[:, 0, K + 1]
    return y, logpz, logdet, z, None


if __name__ == "__main__":
    def reference(x, params):
        feat = jnp.maximum(
            jnp.einsum("bihw,if->bfhw", x, params["w_conv"])
            + params["b_conv"][None, :, None, None], 0.0)
        z = (feat * jnp.exp(params["s"])[None, :, None, None]
             + params["t"][None, :, None, None])
        b, _, h, w = x.shape
        logdet = jnp.full((b,), h * w * jnp.sum(params["s"]))
        logpz = -0.5 * jnp.sum(z ** 2 + np.log(2.0 * np.pi), axis=(1, 2, 3))
        pooled = jnp.mean(feat, axis=(2, 3))
        y = pooled @ params["wfc"] + params["bfc"][None, :]
        return y, logpz, logdet, z

    def check(x, params, tile_hw):
        y, logpz, logdet, z, _ = jax.block_until_ready(
            dhm_forward(x, params, tile_hw=tile_hw))
        y_r, logpz_r, logdet_r, z_r = reference(x, params)
        np.testing.assert_allclose(np.asarray(y), np.asarray(y_r), rtol=1e-4, atol=1e-4)
        np.testing.assert_allclose(np.asarray(z), np.asarray(z_r), rtol=1e-4, atol=1e-4)
        np.testing.assert_allclose(np.asarray(logdet), np.asarray(logdet_r),
                                   rtol=1e-4, atol=1e-3)
        np.testing.assert_allclose(np.asarray(logpz), np.asarray(logpz_r),
                                   rtol=1e-4, atol=1e-2)

    key = jax.random.PRNGKey(0)
    kx, kw, kb, ks, kt, kwf, kbf, kx2 = jax.random.split(key, 8)

    B, Cin, H, W = 2, 4, 16, 16
    Cf, K = 32, 10

    params = dict(
        w_conv=jax.random.normal(kw, (Cin, Cf), jnp.float32) * 0.1,
        b_conv=jax.random.normal(kb, (Cf,), jnp.float32) * 0.1,
        s=jax.random.normal(ks, (Cf,), jnp.float32) * 0.05,
        t=jax.random.normal(kt, (Cf,), jnp.float32) * 0.05,
        wfc=jax.random.normal(kwf, (Cf, K), jnp.float32) * 0.1,
        bfc=jax.random.normal(kbf, (K,), jnp.float32) * 0.1,
    )

    x = jax.random.normal(kx, (B, Cin, H, W), jnp.float32)
    # Multi-tile reduction path (2 HW tiles per sample) and the default tiling.
    check(x, params, tile_hw=128)
    check(x, params, tile_hw=None)

    # Non-128-divisible spatial extent: HW=225 padded to 256, masked reductions.
    x_odd = jax.random.normal(kx2, (B, Cin, 15, 15), jnp.float32)
    check(x_odd, params, tile_hw=None)

    print("KERNEL_OK")
</pallas_src>

<mosaic_0001>
module attributes {stable_mosaic.version = 11 : i64} {
  func.func @dhm_fused_kernel(%arg0: i32, %arg1: i32, %arg2: memref<1x8x128xf32, #tpu.memory_space<vmem>>, %arg3: memref<32x8xf32, #tpu.memory_space<vmem>>, %arg4: memref<32x128xf32, #tpu.memory_space<vmem>>, %arg5: memref<32x128xf32, #tpu.memory_space<vmem>>, %arg6: memref<1x128xf32, #tpu.memory_space<vmem>>, %arg7: memref<1x32x128xf32, #tpu.memory_space<vmem>>, %arg8: memref<1x1x128xf32, #tpu.memory_space<vmem>>, %arg9: memref<32x128xf32, #tpu.memory_space<vmem>>, %arg10: memref<32x128xf32, #tpu.memory_space<vmem>>) attributes {dimension_semantics = [#tpu.dimension_semantics<parallel>, #tpu.dimension_semantics<arbitrary>], iteration_bounds = array<i64: 2, 2>, scalar_prefetch = 0 : i64, scratch_operands = 2 : i64, tpu.core_type = #tpu.core_type<tc>, window_params = [{transform_indices = @transform_0, window_bounds = array<i64: 1, 8, 128>}, {pipeline_mode = #tpu.pipeline_mode<synchronous>, transform_indices = @transform_1, window_bounds = array<i64: 32, 8>}, {pipeline_mode = #tpu.pipeline_mode<synchronous>, transform_indices = @transform_2, window_bounds = array<i64: 32, 128>}, {pipeline_mode = #tpu.pipeline_mode<synchronous>, transform_indices = @transform_3, window_bounds = array<i64: 32, 128>}, {pipeline_mode = #tpu.pipeline_mode<synchronous>, transform_indices = @transform_4, window_bounds = array<i64: 1, 128>}, {transform_indices = @transform_5, window_bounds = array<i64: 1, 32, 128>}, {transform_indices = @transform_6, window_bounds = array<i64: 1, 1, 128>}]} {
    %c0_i32 = arith.constant 0 : i32
    %0 = arith.cmpi eq, %arg1, %c0_i32 : i32
    %1 = arith.extui %0 : i1 to i32
    %c0_i32_0 = arith.constant 0 : i32
    %2 = arith.cmpi ne, %1, %c0_i32_0 : i32
    scf.if %2 {
      %cst_22 = arith.constant 0.000000e+00 : f32
      %31 = vector.broadcast %cst_22 : f32 to vector<32x128xf32>
      %c0_23 = arith.constant 0 : index
      %c0_24 = arith.constant 0 : index
      %32 = vector.load %arg9[%c0_23, %c0_24] : memref<32x128xf32, #tpu.memory_space<vmem>>, vector<32x128xf32>
      tpu.vector_store %arg9[%c0_23, %c0_24], %31 {strides = array<i32>} : memref<32x128xf32, #tpu.memory_space<vmem>>, vector<32x128xf32>,
      %cst_25 = arith.constant 0.000000e+00 : f32
      %33 = vector.broadcast %cst_25 : f32 to vector<32x128xf32>
      %c0_26 = arith.constant 0 : index
      %c0_27 = arith.constant 0 : index
      %34 = vector.load %arg10[%c0_26, %c0_27] : memref<32x128xf32, #tpu.memory_space<vmem>>, vector<32x128xf32>
      tpu.vector_store %arg10[%c0_26, %c0_27], %33 {strides = array<i32>} : memref<32x128xf32, #tpu.memory_space<vmem>>, vector<32x128xf32>,
    } else {
    }
    %c0 = arith.constant 0 : index
    %c0_1 = arith.constant 0 : index
    %c0_2 = arith.constant 0 : index
    %3 = vector.load %arg2[%c0, %c0_1, %c0_2] : memref<1x8x128xf32, #tpu.memory_space<vmem>>, vector<1x8x128xf32>
    %4 = vector.shape_cast %3 : vector<1x8x128xf32> to vector<8x128xf32>
    %c0_3 = arith.constant 0 : index
    %c0_4 = arith.constant 0 : index
    %5 = vector.load %arg4[%c0_3, %c0_4] : memref<32x128xf32, #tpu.memory_space<vmem>>, vector<32x1xf32>
    %c0_5 = arith.constant 0 : index
    %c1 = arith.constant 1 : index
    %6 = vector.load %arg4[%c0_5, %c1] : memref<32x128xf32, #tpu.memory_space<vmem>>, vector<32x1xf32>
    %c0_6 = arith.constant 0 : index
    %c2 = arith.constant 2 : index
    %7 = vector.load %arg4[%c0_6, %c2] : memref<32x128xf32, #tpu.memory_space<vmem>>, vector<32x1xf32>
    %c0_7 = arith.constant 0 : index
    %c0_8 = arith.constant 0 : index
    %8 = vector.load %arg3[%c0_7, %c0_8] : memref<32x8xf32, #tpu.memory_space<vmem>>, vector<32x8xf32>
    %cst = arith.constant dense<0.000000e+00> : vector<32x128xf32>
    %9 = tpu.matmul %8, %4, %cst {dimension_numbers = #tpu.dot_dimension_numbers<[1], [0], [0], [1], [0, 0, 1, 1], [], []>} : vector<32x8xf32>, vector<8x128xf32>, vector<32x128xf32> -> vector<32x128xf32>
    %10 = vector.broadcast %5 : vector<32x1xf32> to vector<32x128xf32>
    %11 = arith.addf %9, %10 : vector<32x128xf32>
    %cst_9 = arith.constant 0.000000e+00 : f32
    %12 = vector.broadcast %cst_9 : f32 to vector<32x128xf32>
    %13 = arith.maximumf %11, %12 : vector<32x128xf32>
    %14 = vector.broadcast %6 : vector<32x1xf32> to vector<32x128xf32>
    %15 = arith.mulf %13, %14 : vector<32x128xf32>
    %16 = vector.broadcast %7 : vector<32x1xf32> to vector<32x128xf32>
    %17 = arith.addf %15, %16 : vector<32x128xf32>
    %c0_10 = arith.constant 0 : index
    %c0_11 = arith.constant 0 : index
    %c0_12 = arith.constant 0 : index
    %18 = vector.load %arg7[%c0_10, %c0_11, %c0_12] : memref<1x32x128xf32, #tpu.memory_space<vmem>>, vector<1x32x128xf32>
    %19 = vector.shape_cast %18 : vector<1x32x128xf32> to vector<32x128xf32>
    %20 = vector.shape_cast %17 : vector<32x128xf32> to vector<1x32x128xf32>
    tpu.vector_store %arg7[%c0_10, %c0_11, %c0_12], %20 {strides = array<i32>} : memref<1x32x128xf32, #tpu.memory_space<vmem>>, vector<1x32x128xf32>,
    %21 = arith.mulf %17, %17 : vector<32x128xf32>
    %c0_13 = arith.constant 0 : index
    %c0_14 = arith.constant 0 : index
    %22 = vector.load %arg9[%c0_13, %c0_14] : memref<32x128xf32, #tpu.memory_space<vmem>>, vector<32x128xf32>
    %23 = arith.addf %22, %13 : vector<32x128xf32>
    %c0_15 = arith.constant 0 : index
    %c0_16 = arith.constant 0 : index
    %24 = vector.load %arg9[%c0_15, %c0_16] : memref<32x128xf32, #tpu.memory_space<vmem>>, vector<32x128xf32>
    tpu.vector_store %arg9[%c0_15, %c0_16], %23 {strides = array<i32>} : memref<32x128xf32, #tpu.memory_space<vmem>>, vector<32x128xf32>,
    %c0_17 = arith.constant 0 : index
    %c0_18 = arith.constant 0 : index
    %25 = vector.load %arg10[%c0_17, %c0_18] : memref<32x128xf32, #tpu.memory_space<vmem>>, vector<32x128xf32>
    %26 = arith.addf %25, %21 : vector<32x128xf32>
    %c0_19 = arith.constant 0 : index
    %c0_20 = arith.constant 0 : index
    %27 = vector.load %arg10[%c0_19, %c0_20] : memref<32x128xf32, #tpu.memory_space<vmem>>, vector<32x128xf32>
    tpu.vector_store %arg10[%c0_19, %c0_20], %26 {strides = array<i32>} : memref<32x128xf32, #tpu.memory_space<vmem>>, vector<32x128xf32>,
    %c1_i32 = arith.constant 1 : i32
    %28 = arith.cmpi eq, %arg1, %c1_i32 : i32
    %29 = arith.extui %28 : i1 to i32
    %c0_i32_21 = arith.constant 0 : i32
    %30 = arith.cmpi ne, %29, %c0_i32_21 : i32
    scf.if %30 {
      %c0_22 = arith.constant 0 : index
      %c0_23 = arith.constant 0 : index
      %31 = vector.load %arg10[%c0_22, %c0_23] : memref<32x128xf32, #tpu.memory_space<vmem>>, vector<32x128xf32>
      %32 = vector.shape_cast %31 : vector<32x128xf32> to vector<1x32x128xf32>
      %cst_24 = arith.constant dense<0.000000e+00> : vector<1xf32>
      %33 = vector.multi_reduction <add>, %32, %cst_24 [1, 2] : vector<1x32x128xf32> to vector<1xf32>
      %34 = vector.shape_cast %33 : vector<1xf32> to vector<1x1x1xf32>
      %35 = vector.extract %34[0, 0, 0] : f32 from vector<1x1x1xf32>
      %36 = vector.broadcast %35 : f32 to vector<1x1xf32>
      %cst_25 = arith.constant 8.192000e+03 : f32
      %cst_26 = arith.constant 1.83787704 : f32
      %37 = arith.mulf %cst_25, %cst_26 : f32
      %38 = vector.broadcast %37 : f32 to vector<1x1xf32>
      %39 = arith.addf %36, %38 : vector<1x1xf32>
      %cst_27 = arith.constant -5.000000e-01 : f32
      %40 = vector.broadcast %cst_27 : f32 to vector<1x1xf32>
      %41 = arith.mulf %40, %39 : vector<1x1xf32>
      %c0_28 = arith.constant 0 : index
      %c3 = arith.constant 3 : index
      %42 = vector.load %arg4[%c0_28, %c3] : memref<32x128xf32, #tpu.memory_space<vmem>>, vector<32x1xf32>
      %43 = vector.shape_cast %42 : vector<32x1xf32> to vector<1x32x1xf32>
      %cst_29 = arith.constant dense<0.000000e+00> : vector<1xf32>
      %44 = vector.multi_reduction <add>, %43, %cst_29 [1, 2] : vector<1x32x1xf32> to vector<1xf32>
      %45 = vector.shape_cast %44 : vector<1xf32> to vector<1x1x1xf32>
      %46 = vector.extract %45[0, 0, 0] : f32 from vector<1x1x1xf32>
      %47 = vector.broadcast %46 : f32 to vector<1x1xf32>
      %cst_30 = arith.constant 2.560000e+02 : f32
      %48 = vector.broadcast %cst_30 : f32 to vector<1x1xf32>
      %49 = arith.mulf %48, %47 : vector<1x1xf32>
      %c0_31 = arith.constant 0 : index
      %c0_32 = arith.constant 0 : index
      %50 = vector.load %arg9[%c0_31, %c0_32] : memref<32x128xf32, #tpu.memory_space<vmem>>, vector<32x128xf32>
      %cst_33 = arith.constant dense<0.000000e+00> : vector<32xf32>
      %51 = vector.multi_reduction <add>, %50, %cst_33 [1] : vector<32x128xf32> to vector<32xf32>
      %52 = vector.shape_cast %51 : vector<32xf32> to vector<32x1xf32>
      %cst_34 = arith.constant 3.906250e-03 : f32
      %53 = vector.broadcast %cst_34 : f32 to vector<32x1xf32>
      %54 = arith.mulf %52, %53 : vector<32x1xf32>
      %c0_35 = arith.constant 0 : index
      %c0_36 = arith.constant 0 : index
      %55 = vector.load %arg5[%c0_35, %c0_36] : memref<32x128xf32, #tpu.memory_space<vmem>>, vector<32x128xf32>
      %56 = vector.broadcast %54 : vector<32x1xf32> to vector<32x128xf32>
      %57 = arith.mulf %56, %55 : vector<32x128xf32>
      %cst_37 = arith.constant dense<0.000000e+00> : vector<128xf32>
      %58 = vector.multi_reduction <add>, %57, %cst_37 [0] : vector<32x128xf32> to vector<128xf32>
      %59 = vector.shape_cast %58 : vector<128xf32> to vector<1x128xf32>
      %c0_38 = arith.constant 0 : index
      %c0_39 = arith.constant 0 : index
      %60 = vector.load %arg6[%c0_38, %c0_39] : memref<1x128xf32, #tpu.memory_space<vmem>>, vector<1x128xf32>
      %61 = arith.addf %59, %60 : vector<1x128xf32>
      %62 = tpu.iota {dimensions = array<i32: 1>} : vector<1x128xi32>
      %c10_i32 = arith.constant 10 : i32
      %63 = vector.broadcast %c10_i32 : i32 to vector<1x128xi32>
      %64 = arith.cmpi eq, %62, %63 : vector<1x128xi32>
      %65 = vector.shape_cast %41 : vector<1x1xf32> to vector<1x1xf32>
      %66 = vector.broadcast %65 : vector<1x1xf32> to vector<1x128xf32>
      %67 = arith.select %64, %66, %61 : vector<1x128xi1>, vector<1x128xf32>
      %c11_i32 = arith.constant 11 : i32
      %68 = vector.broadcast %c11_i32 : i32 to vector<1x128xi32>
      %69 = arith.cmpi eq, %62, %68 : vector<1x128xi32>
      %70 = vector.shape_cast %49 : vector<1x1xf32> to vector<1x1xf32>
      %71 = vector.broadcast %70 : vector<1x1xf32> to vector<1x128xf32>
      %72 = arith.select %69, %71, %67 : vector<1x128xi1>, vector<1x128xf32>
      %c0_40 = arith.constant 0 : index
      %c0_41 = arith.constant 0 : index
      %c0_42 = arith.constant 0 : index
      %73 = vector.load %arg8[%c0_40, %c0_41, %c0_42] : memref<1x1x128xf32, #tpu.memory_space<vmem>>, vector<1x1x128xf32>
      %74 = vector.shape_cast %73 : vector<1x1x128xf32> to vector<1x128xf32>
      %75 = vector.shape_cast %72 : vector<1x128xf32> to vector<1x1x128xf32>
      tpu.vector_store %arg8[%c0_40, %c0_41, %c0_42], %75 {strides = array<i32>} : memref<1x1x128xf32, #tpu.memory_space<vmem>>, vector<1x1x128xf32>,
    } else {
    }
    return
  }
  func.func @transform_0(%arg0: i32, %arg1: i32) -> (i32, i32, i32) {
    %c0_i32 = arith.constant 0 : i32
    %c0_i32_0 = arith.constant 0 : i32
    return %arg0, %c0_i32, %arg1 : i32, i32, i32
  }
  func.func @transform_1(%arg0: i32, %arg1: i32) -> (i32, i32) {
    %c0_i32 = arith.constant 0 : i32
    %c0_i32_0 = arith.constant 0 : i32
    %c0_i32_1 = arith.constant 0 : i32
    return %c0_i32, %c0_i32_0 : i32, i32
  }
  func.func @transform_2(%arg0: i32, %arg1: i32) -> (i32, i32) {
    %c0_i32 = arith.constant 0 : i32
    %c0_i32_0 = arith.constant 0 : i32
    %c0_i32_1 = arith.constant 0 : i32
    return %c0_i32, %c0_i32_0 : i32, i32
  }
  func.func @transform_3(%arg0: i32, %arg1: i32) -> (i32, i32) {
    %c0_i32 = arith.constant 0 : i32
    %c0_i32_0 = arith.constant 0 : i32
    %c0_i32_1 = arith.constant 0 : i32
    return %c0_i32, %c0_i32_0 : i32, i32
  }
  func.func @transform_4(%arg0: i32, %arg1: i32) -> (i32, i32) {
    %c0_i32 = arith.constant 0 : i32
    %c0_i32_0 = arith.constant 0 : i32
    %c0_i32_1 = arith.constant 0 : i32
    return %c0_i32, %c0_i32_0 : i32, i32
  }
  func.func @transform_5(%arg0: i32, %arg1: i32) -> (i32, i32, i32) {
    %c0_i32 = arith.constant 0 : i32
    %c0_i32_0 = arith.constant 0 : i32
    return %arg0, %c0_i32, %arg1 : i32, i32, i32
  }
  func.func @transform_6(%arg0: i32, %arg1: i32) -> (i32, i32, i32) {
    %c0_i32 = arith.constant 0 : i32
    %c0_i32_0 = arith.constant 0 : i32
    %c0_i32_1 = arith.constant 0 : i32
    return %arg0, %c0_i32, %c0_i32_0 : i32, i32, i32
  }
}

</mosaic_0001>

<llo_original>
// kernel: tpu_custom_call.1
$region0: #{tpu_custom_call.1}
  #allocation0 [shape = 'u32[]', space=smem, size = 0x4, offset = 0x4, fixed_abs, tag = 'smem constant byte address 0x4 - core index']
  #allocation1 [shape = 'u32[144,128]{1,0:T(1,128)}', space=vmem, size = 0x12000, scoped, tag = 'internal scratch']
  #allocation2 [shape = 'f32[32,128]{1,0:T(8,128)}', space=vmem, size = 0x4000, scoped, tag = 'scratch operand']
  #allocation3 [shape = 'f32[32,128]{1,0:T(8,128)}', space=vmem, size = 0x4000, scoped, tag = 'scratch operand']
  %s0 = inlined_call_operand.vmem [shape: f32[2,8,256], index: 0, kind: input, shape index: {}]
  %s1 = inlined_call_operand.vmem [shape: f32[32,8], index: 1, kind: input, shape index: {}]
  %s2 = inlined_call_operand.hbm [shape: f32[32,128], index: 2, kind: input, shape index: {}]
  %s3 = inlined_call_operand.hbm [shape: f32[32,128], index: 3, kind: input, shape index: {}]
  %s4 = inlined_call_operand.vmem [shape: f32[1,128], index: 4, kind: input, shape index: {}]
  %s5 = inlined_call_operand.hbm [shape: f32[2,32,256], index: 5, kind: output, shape index: {0}]
  %s6 = inlined_call_operand.hbm [shape: f32[2,1,128], index: 6, kind: output, shape index: {1}]
  %7 = xla_tuple %s5, %s6
  %s8 = sld [smem:[#allocation0]]
  $region77: #{tpu_custom_call.1} parent=0
    _
  %s10 = ssub.s32 1, %s8
  %s11 = scalar_select 0, %s10, %s8
  $region1: #{tpu_custom_call.1} parent=0
    #allocation4 [shape = 'u8[16384]{0}', space=vmem, size = 0x4000, scoped, tag = 'input window, operand 2, single buffered']
    #allocation5 [shape = 's32[2]{0}', space=sflag, size = 0x8, scoped, tag = 'scoped memory for tpu_custom_call.1']
    #allocation6 [shape = 's32[2]{0}', space=sflag, size = 0x8, scoped, tag = 'scoped memory for tpu_custom_call.1']
    #allocation7 [shape = 'u8[16384]{0}', space=vmem, size = 0x4000, scoped, tag = 'input window, operand 3, single buffered']
    #allocation8 [shape = 's32[1]{0}', space=sflag, size = 0x4, scoped, tag = 'scoped memory for tpu_custom_call.1']
    #allocation9 [shape = 'u8[32768]{0}', space=vmem, size = 0x8000, scoped, tag = 'output window, operand 0']
    #allocation10 [shape = 'u8[1024]{0}', space=vmem, size = 0x400, scoped, tag = 'output window, operand 1']
    #allocation11 [shape = 's32[2]{0}', space=sflag, size = 0x8, scoped, tag = 'scoped memory for tpu_custom_call.1']
    %12 = vsyncpa [#allocation5], 0
    %13 = vsyncpa [#allocation8], 0
    %14 = vsyncpa [#allocation6], 0
    %s15 = scalar_lea.sflag [#allocation6], 1
    %16 = vsyncpa %s15, 0
    %17 = vsyncpa [#allocation11], 0
    %s18 = scalar_lea.sflag [#allocation11], 1
    %19 = vsyncpa %s18, 0
    loop: start=0, step=1, limit=6
    $region2: #{tpu_custom_call.1} parent=1 // loop_pre_header
      _
    $region3: #{tpu_custom_call.1} parent=1 // loop_header
      %s21 = sphi 0, %s25
      %p22 = scmp.ge.s32.totalorder %s21, 6
      %s28 = sphi 0, %s40
      %s29 = sphi 0, %s36
      %s30 = sphi 0, %s28
      %s31 = sphi 0, %s29
      %s32 = sphi 0, %s30
      %s33 = sphi 0, %s31
      %s45 = sphi 0, %s47
      %s48 = sphi 0, %s45
      %s49 = sphi 0, %s48
      %s65 = sphi 0, %s49
      %s69 = sphi 0, %s69
      %s71 = sphi 0, %s69
      %s72 = sphi 0, %s71
      %s86 = sphi 0, %s72
      %s90 = sphi 0, %s90
      %s92 = sphi 0, %s90
      %s93 = sphi 0, %s92
      %s107 = sphi 0, %s93
      %s111 = sphi 0, %s111
      %s113 = sphi 0, %s111
      %s114 = sphi 0, %s113
      %s128 = sphi 0, %s114
      %s132 = sphi 0, %s132
      %s134 = sphi 0, %s132
      %s135 = sphi 0, %s134
      %s149 = sphi 0, %s135
      %s157 = sphi 0, %s159
      %s160 = sphi 0, %s157
      %s161 = sphi 0, %s160
      %s177 = sphi 0, %s161
      %s183 = sphi 0, %s185
      %s186 = sphi 0, %s183
      %s187 = sphi 0, %s186
      %s203 = sphi 0, %s187
    $region4: #{tpu_custom_call.1} parent=1 // loop_header_branch
      %24 = sbr.rel (%p22) target = $region8
    $region5: #{tpu_custom_call.1} parent=1 // loop_body
      %s26 = ssub.s32 %s21, 1
      %s27 = ssub.s32 %s21, 2
      %s34 = sadd.s32 1, %s29
      %p35 = scmp.ge.s32.totalorder %s34, 2
      %s36 = scalar_select %p35, 0, %s34
      %s37 = sadd.s32 1, %s28
      %s38 = scalar_select %p35, %s37, %s28
      %p39 = scmp.ge.s32.totalorder %s38, 2
      %s40 = scalar_select %p39, 0, %s38
      %s41 = ssub.s32 %s28, %s40
      %s42 = ssub.s32 %s29, %s36
      %s43 = sor.u32 %s41, %s42
      %p44 = scmp.eq.s32.totalorder %s43, 0
      %s46 = sadd.s32 %s45, 1
      %s47 = scalar_select %p44, %s45, %s46
      %p50 = pneg %p44
      %p51 = scmp.eq.s32.totalorder %s21, 3
      %p52 = por %p50, %p51
      %p53 = scmp.ne.s32.totalorder %s45, %s48
      %p54 = scmp.eq.s32.totalorder %s21, 0
      %p55 = por %p53, %p54
      %p56 = scmp.ne.s32.totalorder %s45, %s48
      %p57 = scmp.eq.s32.totalorder %s26, 3
      %p58 = por %p56, %p57
      %p59 = scmp.ne.s32.totalorder %s48, %s49
      %p60 = scmp.eq.s32.totalorder %s26, 0
      %p61 = por %p59, %p60
      %p62 = scmp.ne.s32.totalorder %s48, %s49
      %p63 = scmp.eq.s32.totalorder %s27, 3
      %p64 = por %p62, %p63
      %p66 = scmp.ne.s32.totalorder %s49, %s65
      %p67 = scmp.eq.s32.totalorder %s27, 0
      %p68 = por %p66, %p67
      %s70 = sadd.s32 %s69, 1
      %p73 = scmp.eq.s32.totalorder %s21, 3
      %p74 = scmp.ne.s32.totalorder %s69, %s71
      %p75 = scmp.eq.s32.totalorder %s21, 0
      %p76 = por %p74, %p75
      %p77 = scmp.ne.s32.totalorder %s69, %s71
      %p78 = scmp.eq.s32.totalorder %s26, 3
      %p79 = por %p77, %p78
      %p80 = scmp.ne.s32.totalorder %s71, %s72
      %p81 = scmp.eq.s32.totalorder %s26, 0
      %p82 = por %p80, %p81
      %p83 = scmp.ne.s32.totalorder %s71, %s72
      %p84 = scmp.eq.s32.totalorder %s27, 3
      %p85 = por %p83, %p84
      %p87 = scmp.ne.s32.totalorder %s72, %s86
      %p88 = scmp.eq.s32.totalorder %s27, 0
      %p89 = por %p87, %p88
      %s91 = sadd.s32 %s90, 1
      %p94 = scmp.eq.s32.totalorder %s21, 3
      %p95 = scmp.ne.s32.totalorder %s90, %s92
      %p96 = scmp.eq.s32.totalorder %s21, 0
      %p97 = por %p95, %p96
      %p98 = scmp.ne.s32.totalorder %s90, %s92
      %p99 = scmp.eq.s32.totalorder %s26, 3
      %p100 = por %p98, %p99
      %p101 = scmp.ne.s32.totalorder %s92, %s93
      %p102 = scmp.eq.s32.totalorder %s26, 0
      %p103 = por %p101, %p102
      %p104 = scmp.ne.s32.totalorder %s92, %s93
      %p105 = scmp.eq.s32.totalorder %s27, 3
      %p106 = por %p104, %p105
      %p108 = scmp.ne.s32.totalorder %s93, %s107
      %p109 = scmp.eq.s32.totalorder %s27, 0
      %p110 = por %p108, %p109
      %s112 = sadd.s32 %s111, 1
      %p115 = scmp.eq.s32.totalorder %s21, 3
      %p116 = scmp.ne.s32.totalorder %s111, %s113
      %p117 = scmp.eq.s32.totalorder %s21, 0
      %p118 = por %p116, %p117
      %p119 = scmp.ne.s32.totalorder %s111, %s113
      %p120 = scmp.eq.s32.totalorder %s26, 3
      %p121 = por %p119, %p120
      %p122 = scmp.ne.s32.totalorder %s113, %s114
      %p123 = scmp.eq.s32.totalorder %s26, 0
      %p124 = por %p122, %p123
      %p125 = scmp.ne.s32.totalorder %s113, %s114
      %p126 = scmp.eq.s32.totalorder %s27, 3
      %p127 = por %p125, %p126
      %p129 = scmp.ne.s32.totalorder %s114, %s128
      %p130 = scmp.eq.s32.totalorder %s27, 0
      %p131 = por %p129, %p130
      %s133 = sadd.s32 %s132, 1
      %p136 = scmp.eq.s32.totalorder %s21, 3
      %p137 = scmp.ne.s32.totalorder %s132, %s134
      %p138 = scmp.eq.s32.totalorder %s21, 0
      %p139 = por %p137, %p138
      %p140 = scmp.ne.s32.totalorder %s132, %s134
      %p141 = scmp.eq.s32.totalorder %s26, 3
      %p142 = por %p140, %p141
      %p143 = scmp.ne.s32.totalorder %s134, %s135
      %p144 = scmp.eq.s32.totalorder %s26, 0
      %p145 = por %p143, %p144
      %p146 = scmp.ne.s32.totalorder %s134, %s135
      %p147 = scmp.eq.s32.totalorder %s27, 3
      %p148 = por %p146, %p147
      %p150 = scmp.ne.s32.totalorder %s135, %s149
      %p151 = scmp.eq.s32.totalorder %s27, 0
      %p152 = por %p150, %p151
      %s153 = ssub.s32 %s28, %s40
      %s154 = ssub.s32 %s29, %s36
      %s155 = sor.u32 %s153, %s154
      %p156 = scmp.eq.s32.totalorder %s155, 0
      %s158 = sadd.s32 %s157, 1
      %s159 = scalar_select %p156, %s157, %s158
      %p162 = pneg %p156
      %p163 = scmp.eq.s32.totalorder %s21, 3
      %p164 = por %p162, %p163
      %p165 = scmp.ne.s32.totalorder %s157, %s160
      %p166 = scmp.eq.s32.totalorder %s21, 0
      %p167 = por %p165, %p166
      %p168 = scmp.ne.s32.totalorder %s157, %s160
      %p169 = scmp.eq.s32.totalorder %s26, 3
      %p170 = por %p168, %p169
      %p171 = scmp.ne.s32.totalorder %s160, %s161
      %p172 = scmp.eq.s32.totalorder %s26, 0
      %p173 = por %p171, %p172
      %p174 = scmp.ne.s32.totalorder %s160, %s161
      %p175 = scmp.eq.s32.totalorder %s27, 3
      %p176 = por %p174, %p175
      %p178 = scmp.ne.s32.totalorder %s161, %s177
      %p179 = scmp.eq.s32.totalorder %s27, 0
      %p180 = por %p178, %p179
      %s181 = ssub.s32 %s28, %s40
      %p182 = scmp.eq.s32.totalorder %s181, 0
      %s184 = sadd.s32 %s183, 1
      %s185 = scalar_select %p182, %s183, %s184
      %p188 = pneg %p182
      %p189 = scmp.eq.s32.totalorder %s21, 3
      %p190 = por %p188, %p189
      %p191 = scmp.ne.s32.totalorder %s183, %s186
      %p192 = scmp.eq.s32.totalorder %s21, 0
      %p193 = por %p191, %p192
      %p194 = scmp.ne.s32.totalorder %s183, %s186
      %p195 = scmp.eq.s32.totalorder %s26, 3
      %p196 = por %p194, %p195
      %p197 = scmp.ne.s32.totalorder %s186, %s187
      %p198 = scmp.eq.s32.totalorder %s26, 0
      %p199 = por %p197, %p198
      %p200 = scmp.ne.s32.totalorder %s186, %s187
      %p201 = scmp.eq.s32.totalorder %s27, 3
      %p202 = por %p200, %p201
      %p204 = scmp.ne.s32.totalorder %s187, %s203
      %p205 = scmp.eq.s32.totalorder %s27, 0
      %p206 = por %p204, %p205
      %p207 = scmp.le.s32.totalorder 1, %s21
      %p208 = scmp.lt.s32.totalorder %s21, 5
      %p209 = pnand %p207, %p208
      %p210 = pneg %p209
      // Predicated region
      $region9: #{tpu_custom_call.1} parent=5 // pred_check
        _
      $region10: #{tpu_custom_call.1} parent=5 // pred_check_branch
        %212 = sbr.rel (%p209) target = $region12
      $region11: #{tpu_custom_call.1} parent=5 // pred_region
        %s213 = ssub.s32 %s21, 1
        // Predicated region
        $region13: #{tpu_custom_call.1} parent=11 // pred_check
          %p214 = pneg %p82
        $region14: #{tpu_custom_call.1} parent=11 // pred_check_branch
          %216 = sbr.rel (%p214) target = $region16
        $region15: #{tpu_custom_call.1} parent=11 // pred_region
          _
        $region16: #{tpu_custom_call.1} parent=11 // pred_fallthru
          _
        // Predicated region
        $region17: #{tpu_custom_call.1} parent=11 // pred_check
          %p217 = pneg %p103
        $region18: #{tpu_custom_call.1} parent=11 // pred_check_branch
          %219 = sbr.rel (%p217) target = $region20
        $region19: #{tpu_custom_call.1} parent=11 // pred_region
          %s221 = ssub.s32 512, 512
          %222 = vsyncadd [#allocation5], %s221
          %s223 = sshll.u32 [#allocation4], 4
          %s224 = int_to_ptr.vmem [resolvable:$true] %s223
          %229 = dma.hbm_to_vmem [thread:$0]  %s2, 512, %s224, [#allocation5], 128, 128, 8
        $region20: #{tpu_custom_call.1} parent=11 // pred_fallthru
          _
        // Predicated region
        $region21: #{tpu_custom_call.1} parent=11 // pred_check
          %p230 = pneg %p124
        $region22: #{tpu_custom_call.1} parent=11 // pred_check_branch
          %232 = sbr.rel (%p230) target = $region24
        $region23: #{tpu_custom_call.1} parent=11 // pred_region
          %s234 = ssub.s32 512, 512
          %235 = vsyncadd [#allocation8], %s234
          %s236 = sshll.u32 [#allocation7], 4
          %s237 = int_to_ptr.vmem [resolvable:$true] %s236
          %242 = dma.hbm_to_vmem [thread:$0]  %s3, 512, %s237, [#allocation8], 128, 128, 8
        $region24: #{tpu_custom_call.1} parent=11 // pred_fallthru
          _
        // Predicated region
        $region25: #{tpu_custom_call.1} parent=11 // pred_check
          %p243 = pneg %p145
        $region26: #{tpu_custom_call.1} parent=11 // pred_check_branch
          %245 = sbr.rel (%p243) target = $region28
        $region27: #{tpu_custom_call.1} parent=11 // pred_region
          _
        $region28: #{tpu_custom_call.1} parent=11 // pred_fallthru
          _
      $region12: #{tpu_custom_call.1} parent=5 // pred_fallthru
        _
      %p246 = scmp.lt.s32.totalorder %s21, 4
      // Predicated region
      $region29: #{tpu_custom_call.1} parent=5 // pred_check
        %p247 = pneg %p246
      $region30: #{tpu_custom_call.1} parent=5 // pred_check_branch
        %249 = sbr.rel (%p247) target = $region32
      $region31: #{tpu_custom_call.1} parent=5 // pred_region
        // Predicated region
        $region33: #{tpu_custom_call.1} parent=31 // pred_check
          %p250 = pneg %p55
        $region34: #{tpu_custom_call.1} parent=31 // pred_check_branch
          %252 = sbr.rel (%p250) target = $region36
        $region35: #{tpu_custom_call.1} parent=31 // pred_region
          %p253 = scmp.lt.s32.totalorder %s28, 1
          %s254 = scalar_select %p253, %s28, 1
          %p255 = scmp.lt.s32.totalorder %s29, 1
          %s256 = scalar_select %p255, %s29, 1
          %s257 = smul.addr %s254, 2
          %s258 = sadd.s32 %s256, %s257
          %s259 = smul.addr %s258, 8
          %s260 = scalar_lea.vmem %s0, %s259
        $region36: #{tpu_custom_call.1} parent=31 // pred_fallthru
          _
      $region32: #{tpu_custom_call.1} parent=5 // pred_fallthru
        _
      %p261 = scmp.le.s32.totalorder 1, %s21
      %p262 = scmp.lt.s32.totalorder %s21, 5
      %p263 = pnand %p261, %p262
      %p264 = pneg %p263
      // Predicated region
      $region37: #{tpu_custom_call.1} parent=5 // pred_check
        _
      $region38: #{tpu_custom_call.1} parent=5 // pred_check_branch
        %266 = sbr.rel (%p263) target = $region40
      $region39: #{tpu_custom_call.1} parent=5 // pred_region
        %s267 = ssub.s32 %s21, 1
        // Predicated region
        $region41: #{tpu_custom_call.1} parent=39 // pred_check
          %p268 = pneg %p103
        $region42: #{tpu_custom_call.1} parent=39 // pred_check_branch
          %270 = sbr.rel (%p268) target = $region44
        $region43: #{tpu_custom_call.1} parent=39 // pred_region
          %271 = dma.done [#allocation5], 512
        $region44: #{tpu_custom_call.1} parent=39 // pred_fallthru
          _
        // Predicated region
        $region45: #{tpu_custom_call.1} parent=39 // pred_check
          %p272 = pneg %p124
        $region46: #{tpu_custom_call.1} parent=39 // pred_check_branch
          %274 = sbr.rel (%p272) target = $region48
        $region47: #{tpu_custom_call.1} parent=39 // pred_region
          %275 = dma.done [#allocation8], 512
        $region48: #{tpu_custom_call.1} parent=39 // pred_fallthru
          _
        %p276 = scmp.lt.s32.totalorder %s30, 1
        %s277 = scalar_select %p276, %s30, 1
        %p278 = scmp.lt.s32.totalorder %s31, 1
        %s279 = scalar_select %p278, %s31, 1
        %s280 = smul.addr %s277, 2
        %s281 = sadd.s32 %s279, %s280
        %s282 = smul.addr %s281, 8
        %s283 = scalar_lea.vmem %s0, %s282
        %p284 = pneg %p61
        %p285 = pneg %p58
        %p286 = pneg %p82
        %p287 = pneg %p79
        %p288 = pneg %p103
        %p289 = pneg %p100
        %p290 = pneg %p124
        %p291 = pneg %p121
        %p292 = pneg %p145
        %p293 = pneg %p142
        %p294 = pneg %p173
        %p295 = pneg %p170
        %s296 = sand.u32 %s160, 1
        %s297 = scalar_lea.sflag [#allocation6], %s296
        %s298 = sand.u32 %s160, 1
        %s299 = smul.addr %s298, 32
        %s300 = scalar_lea.vmem [#allocation9], %s299
        %p301 = pneg %p199
        %p302 = pneg %p196
        %s303 = sand.u32 %s186, 1
        %s304 = scalar_lea.sflag [#allocation11], %s303
        %s305 = sand.u32 %s186, 1
        %s306 = scalar_lea.vmem [#allocation10], %s305
        %p307 = scmp.lt.s32.totalorder %s30, 1
        %s308 = scalar_select %p307, %s30, 1
        %p309 = scmp.lt.s32.totalorder %s31, 1
        %s310 = scalar_select %p309, %s31, 1
        %s311 = smul.addr %s308, 2
        %s312 = sadd.s32 %s310, %s311
        %s313 = smul.addr %s312, 8
        %s314 = scalar_lea.vmem %s0, %s313
        %p315 = scmp.eq.s32.totalorder %s31, 0
        // Predicated region
        $region49: #{tpu_custom_call.1} parent=39 // pred_check
          %p316 = pneg %p315
        $region50: #{tpu_custom_call.1} parent=39 // pred_check_branch
          %318 = sbr.rel (%p316) target = $region52
        $region51: #{tpu_custom_call.1} parent=39 // pred_region
          %319 = vst [vmem:[#allocation2] sm:$0xff] 0.0
          %320 = vst [vmem:[#allocation2 + $0x8] sm:$0xff] 0.0
          %321 = vst [vmem:[#allocation2 + $0x10] sm:$0xff] 0.0
          %322 = vst [vmem:[#allocation2 + $0x18] sm:$0xff] 0.0
          %323 = vst [vmem:[#allocation3] sm:$0xff] 0.0
          %324 = vst [vmem:[#allocation3 + $0x8] sm:$0xff] 0.0
          %325 = vst [vmem:[#allocation3 + $0x10] sm:$0xff] 0.0
          %326 = vst [vmem:[#allocation3 + $0x18] sm:$0xff] 0.0
        $region52: #{tpu_custom_call.1} parent=39 // pred_fallthru
          _
        %v327 = vld [vmem:[%s314] sm:$0xff]
        %v328 = vld [vmem:[#allocation4] sm:$0xff]
        %v329 = vld [vmem:[#allocation4 + $0x8] sm:$0xff]
        %v330 = vld [vmem:[#allocation4 + $0x10] sm:$0xff]
        %v331 = vld [vmem:[#allocation4 + $0x18] sm:$0xff]
        %v332 = vld [vmem:[%s1] sm:$0xff]
        %v333 = vld [vmem:[%s1 + $0x8] sm:$0xff]
        %v334 = vld [vmem:[%s1 + $0x10] sm:$0xff]
        %v335 = vld [vmem:[%s1 + $0x18] sm:$0xff]
        %337 = vset.pattern.permute.xlu0 0
        %338 = vperm.xlu0 %337, %v328
        %v339 = vpop.permute.xlu0 %338
        %342 = vset.pattern.permute.xlu0 0
        %343 = vperm.xlu0 %342, %v329
        %v344 = vpop.permute.xlu0 %343
        %347 = vset.pattern.permute.xlu0 0
        %348 = vperm.xlu0 %347, %v330
        %v349 = vpop.permute.xlu0 %348
        %352 = vset.pattern.permute.xlu0 0
        %353 = vperm.xlu0 %352, %v331
        %v354 = vpop.permute.xlu0 %353
        %vm356 = vcmask 64512
        %v358 = vsel %vm356, %v332, 0
        %v361 = vsel %vm356, %v333, 0
        %v364 = vsel %vm356, %v334, 0
        %v367 = vsel %vm356, %v335, 0
        %369 = vmatprep.subr.mxu0 0.0
        %370 = vmatpush1.msra.mxu0 0.0
        %371 = vmatprep.subr.mxu0 0.0
        %372 = vmatpush1.msra.mxu0 0.0
        %373 = vmatprep.subr.mxu0 0.0
        %374 = vmatpush1.msra.mxu0 0.0
        %375 = vmatprep.subr.mxu0 0.0
        %376 = vmatpush1.msra.mxu0 0.0
        %377 = vmatprep.subr.mxu0 0.0
        %378 = vmatpush1.msra.mxu0 0.0
        %379 = vmatprep.subr.mxu0 0.0
        %380 = vmatpush1.msra.mxu0 0.0
        %381 = vmatprep.subr.mxu0 0.0
        %382 = vmatpush1.msra.mxu0 0.0
        %383 = vmatprep.subr.mxu0 0.0
        %384 = vmatpush1.msra.mxu0 0.0
        %385 = vmatprep.subr.mxu0 0.0
        %386 = vmatpush1.msra.mxu0 0.0
        %387 = vmatprep.subr.mxu0 0.0
        %388 = vmatpush1.msra.mxu0 0.0
        %389 = vmatprep.subr.mxu0 0.0
        %390 = vmatpush1.msra.mxu0 0.0
        %391 = vmatprep.subr.mxu0 0.0
        %392 = vmatpush1.msra.mxu0 0.0
        %393 = vmatprep.subr.mxu0 0.0
        %394 = vmatpush1.msra.mxu0 0.0
        %395 = vmatprep.subr.mxu0 0.0
        %396 = vmatpush1.msra.mxu0 0.0
        %397 = vmatprep.subr.mxu0 0.0
        %398 = vmatpush1.msra.mxu0 0.0
        %399 = vmatprep.subr.mxu0 0.0
        %400 = vmatpush1.msra.mxu0 %v327
        %401 = vmatprep.subr.mxu0 0.0
        %402 = vmatpush2.msra.mxu0 0.0
        %403 = vmatprep.subr.mxu0 0.0
        %404 = vmatpush2.msra.mxu0 0.0
        %405 = vmatprep.subr.mxu0 0.0
        %406 = vmatpush2.msra.mxu0 0.0
        %407 = vmatprep.subr.mxu0 0.0
        %408 = vmatpush2.msra.mxu0 0.0
        %409 = vmatprep.subr.mxu0 0.0
        %410 = vmatpush2.msra.mxu0 0.0
        %411 = vmatprep.subr.mxu0 0.0
        %412 = vmatpush2.msra.mxu0 0.0
        %413 = vmatprep.subr.mxu0 0.0
        %414 = vmatpush2.msra.mxu0 0.0
        %415 = vmatprep.subr.mxu0 0.0
        %416 = vmatpush2.msra.mxu0 0.0
        %417 = vmatprep.subr.mxu0 0.0
        %418 = vmatpush2.msra.mxu0 0.0
        %419 = vmatprep.subr.mxu0 0.0
        %420 = vmatpush2.msra.mxu0 0.0
        %421 = vmatprep.subr.mxu0 0.0
        %422 = vmatpush2.msra.mxu0 0.0
        %423 = vmatprep.subr.mxu0 0.0
        %424 = vmatpush2.msra.mxu0 0.0
        %425 = vmatprep.subr.mxu0 0.0
        %426 = vmatpush2.msra.mxu0 0.0
        %427 = vmatprep.subr.mxu0 0.0
        %428 = vmatpush2.msra.mxu0 0.0
        %429 = vmatprep.subr.mxu0 0.0
        %430 = vmatpush2.msra.mxu0 0.0
        %431 = vmatprep.subr.mxu0 0.0
        %432 = vmatpush2.msra.mxu0 0.0
        %433 = vmatprep.mubr.f32.mxu0 0.0
        %434 = vmatmul.mubr.f32.gmra.mxu0 %v358
        %v435 = vpop.f32.mrf.mxu0
        %v436 = vadd.f32 %v339, %v435
        %v437 = vpop.f32.mrf.mxu0
        %438 = vmatprep.mubr.f32.mxu0 0.0
        %439 = vmatmul.mubr.f32.gmra.mxu0 %v361
        %v440 = vpop.f32.mrf.mxu0
        %v441 = vadd.f32 %v344, %v440
        %v442 = vpop.f32.mrf.mxu0
        %443 = vmatprep.mubr.f32.mxu0 0.0
        %444 = vmatmul.mubr.f32.gmra.mxu0 %v364
        %v445 = vpop.f32.mrf.mxu0
        %v446 = vadd.f32 %v349, %v445
        %v447 = vpop.f32.mrf.mxu0
        %448 = vmatprep.mubr.f32.mxu0 0.0
        %449 = vmatmul.mubr.f32.gmra.mxu0 %v367
        %v450 = vpop.f32.mrf.mxu0
        %v451 = vadd.f32 %v354, %v450
        %v452 = vpop.f32.mrf.mxu0
        %453 = vdwg.mxu0
        %v454 = vmax.f32 %v436, 0.0
        %v455 = vmax.f32 %v441, 0.0
        %v456 = vmax.f32 %v446, 0.0
        %v457 = vmax.f32 %v451, 0.0
        %458 = vset.pattern.permute.xlu0 1
        %459 = vperm.xlu0 %458, %v328
        %v460 = vpop.permute.xlu0 %459
        %462 = vset.pattern.permute.xlu0 1
        %463 = vperm.xlu0 %462, %v329
        %v464 = vpop.permute.xlu0 %463
        %466 = vset.pattern.permute.xlu0 1
        %467 = vperm.xlu0 %466, %v330
        %v468 = vpop.permute.xlu0 %467
        %470 = vset.pattern.permute.xlu0 1
        %471 = vperm.xlu0 %470, %v331
        %v472 = vpop.permute.xlu0 %471
        %v474 = vmul.f32 %v454, %v460
        %v475 = vmul.f32 %v455, %v464
        %v476 = vmul.f32 %v456, %v468
        %v477 = vmul.f32 %v457, %v472
        %478 = vset.pattern.permute.xlu0 2
        %479 = vperm.xlu0 %478, %v328
        %v480 = vpop.permute.xlu0 %479
        %482 = vset.pattern.permute.xlu0 2
        %483 = vperm.xlu0 %482, %v329
        %v484 = vpop.permute.xlu0 %483
        %486 = vset.pattern.permute.xlu0 2
        %487 = vperm.xlu0 %486, %v330
        %v488 = vpop.permute.xlu0 %487
        %490 = vset.pattern.permute.xlu0 2
        %491 = vperm.xlu0 %490, %v331
        %v492 = vpop.permute.xlu0 %491
        %v494 = vadd.f32 %v474, %v480
        %v495 = vadd.f32 %v475, %v484
        %v496 = vadd.f32 %v476, %v488
        %v497 = vadd.f32 %v477, %v492
        %498 = vst [vmem:[%s300] sm:$0xff] %v494
        %499 = vst [vmem:[%s300 + $0x8] sm:$0xff] %v495
        %500 = vst [vmem:[%s300 + $0x10] sm:$0xff] %v496
        %501 = vst [vmem:[%s300 + $0x18] sm:$0xff] %v497
        %v502 = vmul.f32 %v494, %v494
        %v503 = vmul.f32 %v495, %v495
        %v504 = vmul.f32 %v496, %v496
        %v505 = vmul.f32 %v497, %v497
        %v506 = vld [vmem:[#allocation2] sm:$0xff]
        %v507 = vld [vmem:[#allocation2 + $0x8] sm:$0xff]
        %v508 = vld [vmem:[#allocation2 + $0x10] sm:$0xff]
        %v509 = vld [vmem:[#allocation2 + $0x18] sm:$0xff]
        %v510 = vadd.f32 %v506, %v454
        %v511 = vadd.f32 %v507, %v455
        %v512 = vadd.f32 %v508, %v456
        %v513 = vadd.f32 %v509, %v457
        %514 = vst [vmem:[#allocation2] sm:$0xff] %v510
        %515 = vst [vmem:[#allocation2 + $0x8] sm:$0xff] %v511
        %516 = vst [vmem:[#allocation2 + $0x10] sm:$0xff] %v512
        %517 = vst [vmem:[#allocation2 + $0x18] sm:$0xff] %v513
        %v518 = vld [vmem:[#allocation3] sm:$0xff]
        %v519 = vld [vmem:[#allocation3 + $0x8] sm:$0xff]
        %v520 = vld [vmem:[#allocation3 + $0x10] sm:$0xff]
        %v521 = vld [vmem:[#allocation3 + $0x18] sm:$0xff]
        %v522 = vadd.f32 %v518, %v502
        %v523 = vadd.f32 %v519, %v503
        %v524 = vadd.f32 %v520, %v504
        %v525 = vadd.f32 %v521, %v505
        %526 = vst [vmem:[#allocation3] sm:$0xff] %v522
        %527 = vst [vmem:[#allocation3 + $0x8] sm:$0xff] %v523
        %528 = vst [vmem:[#allocation3 + $0x10] sm:$0xff] %v524
        %529 = vst [vmem:[#allocation3 + $0x18] sm:$0xff] %v525
        %p530 = scmp.eq.s32.totalorder %s31, 1
        // Predicated region
        $region53: #{tpu_custom_call.1} parent=39 // pred_check
          %p531 = pneg %p530
        $region54: #{tpu_custom_call.1} parent=39 // pred_check_branch
          %533 = sbr.rel (%p531) target = $region56
        $region55: #{tpu_custom_call.1} parent=39 // pred_region
          %v534 = vld [vmem:[#allocation3] sm:$0xff]
          %v535 = vld [vmem:[#allocation3 + $0x8] sm:$0xff]
          %v536 = vld [vmem:[#allocation3 + $0x10] sm:$0xff]
          %v537 = vld [vmem:[#allocation3 + $0x18] sm:$0xff]
          %v538 = vadd.f32 %v534, %v535
          %v539 = vadd.f32 %v538, %v536
          %v540 = vadd.f32 %v539, %v537
          %541 = vadd.xlane.f32.xlu0 %v540
          %v542 = vpop.xlane.xlu0 %541
          %v543 = vrot.slane %v542, 4
          %v544 = vadd.f32 %v542, %v543
          %v545 = vrot.slane %v544, 2
          %v546 = vadd.f32 %v544, %v545
          %v547 = vrot.slane %v546, 1
          %v548 = vadd.f32 %v546, %v547
          %s549 = vtos %v548
          %v550 = vstv %s549
          %v551 = vadd.f32 %v550, 15055.889
          %v552 = vmul.f32 %v551, -0.5
          %v553 = vld [vmem:[#allocation4] sm:$0xff]
          %v554 = vld [vmem:[#allocation4 + $0x8] sm:$0xff]
          %v555 = vld [vmem:[#allocation4 + $0x10] sm:$0xff]
          %v556 = vld [vmem:[#allocation4 + $0x18] sm:$0xff]
          %561 = vrot.lane.b32.xlu0 %v553, 125
          %v562 = vpop.permute.xlu0 %561
          %563 = vrot.lane.b32.xlu0 %v554, 125
          %v564 = vpop.permute.xlu0 %563
          %565 = vrot.lane.b32.xlu0 %v555, 125
          %v566 = vpop.permute.xlu0 %565
          %567 = vrot.lane.b32.xlu0 %v556, 125
          %v568 = vpop.permute.xlu0 %567
          %vm573 = vcmask 7168
          %v574 = vsel %vm573, %v562, 0.0
          %v575 = vsel %vm573, %v564, 0.0
          %v576 = vadd.f32 %v574, %v575
          %v577 = vsel %vm573, %v566, 0.0
          %v578 = vadd.f32 %v576, %v577
          %v579 = vsel %vm573, %v568, 0.0
          %v580 = vadd.f32 %v578, %v579
          %581 = vadd.xlane.f32.xlu0 %v580
          %v582 = vpop.xlane.xlu0 %581
          %v583 = vrot.slane %v582, 4
          %v584 = vadd.f32 %v582, %v583
          %v585 = vrot.slane %v584, 2
          %v586 = vadd.f32 %v584, %v585
          %v587 = vrot.slane %v586, 1
          %v588 = vadd.f32 %v586, %v587
          %s589 = vtos %v588
          %v590 = vstv %s589
          %v591 = vmul.f32 %v590, 256.0
          %v592 = vld [vmem:[#allocation2] sm:$0xff]
          %v593 = vld [vmem:[#allocation2 + $0x8] sm:$0xff]
          %v594 = vld [vmem:[#allocation2 + $0x10] sm:$0xff]
          %v595 = vld [vmem:[#allocation2 + $0x18] sm:$0xff]
          %596 = vadd.xlane.f32.xlu0 %v592
          %v597 = vpop.xlane.xlu0 %596
          %598 = vadd.xlane.f32.xlu0 %v593
          %v599 = vpop.xlane.xlu0 %598
          %600 = vadd.xlane.f32.xlu0 %v594
          %v601 = vpop.xlane.xlu0 %600
          %602 = vadd.xlane.f32.xlu0 %v595
          %v603 = vpop.xlane.xlu0 %602
          %v604 = vmul.f32 %v597, 0.00390625
          %v605 = vmul.f32 %v599, 0.00390625
          %v606 = vmul.f32 %v601, 0.00390625
          %v607 = vmul.f32 %v603, 0.00390625
          %v608 = vld [vmem:[#allocation7] sm:$0xff]
          %v609 = vld [vmem:[#allocation7 + $0x8] sm:$0xff]
          %v610 = vld [vmem:[#allocation7 + $0x10] sm:$0xff]
          %v611 = vld [vmem:[#allocation7 + $0x18] sm:$0xff]
          %v612 = vmul.f32 %v604, %v608
          %v613 = vmul.f32 %v605, %v609
          %v614 = vmul.f32 %v606, %v610
          %v615 = vmul.f32 %v607, %v611
          %v616 = vadd.f32 %v612, %v613
          %v617 = vadd.f32 %v616, %v614
          %v618 = vadd.f32 %v617, %v615
          %v619 = vrot.slane %v618, 4
          %v620 = vadd.f32 %v618, %v619
          %v621 = vrot.slane %v620, 2
          %v622 = vadd.f32 %v620, %v621
          %v623 = vrot.slane %v622, 1
          %v624 = vadd.f32 %v622, %v623
          %v625 = vld [vmem:[%s4] sm:$0x1]
          %v626 = vadd.f32 %v624, %v625
          %v627 = vlaneseq
          %v628 = vand.u32 %v627, 127
          %vm629 = vcmp.eq.s32.totalorder %v628, 10
          %v630 = vsel %vm629, %v552, %v626
          %vm631 = vcmp.eq.s32.totalorder %v628, 11
          %v632 = vsel %vm631, %v591, %v630
          %633 = vst [vmem:[%s306] sm:$0x1] %v632
        $region56: #{tpu_custom_call.1} parent=39 // pred_fallthru
          _
        %s634 = sand.u32 %s160, 1
        %s635 = scalar_lea.sflag [#allocation6], %s634
        %s636 = sand.u32 %s160, 1
        %s637 = smul.addr %s636, 32
        %s638 = scalar_lea.vmem [#allocation9], %s637
        %s639 = sand.u32 %s186, 1
        %s640 = scalar_lea.sflag [#allocation11], %s639
        %s641 = sand.u32 %s186, 1
        %s642 = scalar_lea.vmem [#allocation10], %s641
        // Predicated region
        $region57: #{tpu_custom_call.1} parent=39 // pred_check
          %p643 = pneg %p170
        $region58: #{tpu_custom_call.1} parent=39 // pred_check_branch
          %645 = sbr.rel (%p643) target = $region60
        $region59: #{tpu_custom_call.1} parent=39 // pred_region
          %s647 = ssub.s32 512, 512
          %648 = vsyncadd %s635, %s647
          %s649 = smul.addr %s30, 8
          %s650 = sadd.s32 %s31, %s649
          %s651 = smul.addr %s650, 128
          %s652 = scalar_lea.hbm %s5, %s651
          %s653 = sshll.u32 %s638, 4
          %s654 = int_to_ptr.vmem [resolvable:$true] %s653
          %659 = dma.vmem_to_hbm [thread:$0]  %s654, 512, %s652, %s635, 128, 256, 8
        $region60: #{tpu_custom_call.1} parent=39 // pred_fallthru
          _
        // Predicated region
        $region61: #{tpu_custom_call.1} parent=39 // pred_check
          %p660 = pneg %p196
        $region62: #{tpu_custom_call.1} parent=39 // pred_check_branch
          %662 = sbr.rel (%p660) target = $region64
        $region63: #{tpu_custom_call.1} parent=39 // pred_region
          %s664 = ssub.s32 16, 16
          %665 = vsyncadd %s640, %s664
          %s666 = smul.addr %s30, 16
          %s667 = scalar_lea.hbm %s6, %s666
          %s669 = sshll.u32 %s642, 4
          %s670 = int_to_ptr.vmem [resolvable:$true] %s669
          %672 = dma.vmem_to_hbm [thread:$0]  %s670, 16, %s667, %s640
        $region64: #{tpu_custom_call.1} parent=39 // pred_fallthru
          _
      $region40: #{tpu_custom_call.1} parent=5 // pred_fallthru
        _
      %p673 = scmp.le.s32.totalorder 2, %s21
      // Predicated region
      $region65: #{tpu_custom_call.1} parent=5 // pred_check
        %p674 = pneg %p673
      $region66: #{tpu_custom_call.1} parent=5 // pred_check_branch
        %676 = sbr.rel (%p674) target = $region68
      $region67: #{tpu_custom_call.1} parent=5 // pred_region
        %s677 = ssub.s32 %s21, 2
        // Predicated region
        $region69: #{tpu_custom_call.1} parent=67 // pred_check
          %p678 = pneg %p176
        $region70: #{tpu_custom_call.1} parent=67 // pred_check_branch
          %680 = sbr.rel (%p678) target = $region72
        $region71: #{tpu_custom_call.1} parent=67 // pred_region
          %s681 = sand.u32 %s161, 1
          %s682 = scalar_lea.sflag [#allocation6], %s681
          %s683 = sand.u32 %s161, 1
          %s684 = smul.addr %s683, 32
          %s685 = scalar_lea.vmem [#allocation9], %s684
          %686 = dma.done %s682, 512
        $region72: #{tpu_custom_call.1} parent=67 // pred_fallthru
          _
        // Predicated region
        $region73: #{tpu_custom_call.1} parent=67 // pred_check
          %p687 = pneg %p202
        $region74: #{tpu_custom_call.1} parent=67 // pred_check_branch
          %689 = sbr.rel (%p687) target = $region76
        $region75: #{tpu_custom_call.1} parent=67 // pred_region
          %s690 = sand.u32 %s187, 1
          %s691 = scalar_lea.sflag [#allocation11], %s690
          %s692 = sand.u32 %s187, 1
          %s693 = scalar_lea.vmem [#allocation10], %s692
          %694 = dma.done %s691, 16
        $region76: #{tpu_custom_call.1} parent=67 // pred_fallthru
          _
      $region68: #{tpu_custom_call.1} parent=5 // pred_fallthru
        _
    $region6: #{tpu_custom_call.1} parent=1 // loop_footer
      %s25 = sadd.s32 1, %s21
    $region7: #{tpu_custom_call.1} parent=1 // loop_footer_branch
      %20 = sbr.rel target = $region3
    $region8: #{tpu_custom_call.1} parent=1 // loop_exit
      _
    %695 = vsyncpa [#allocation5], 1
    %s696 = scalar_lea.sflag [#allocation5], 1
    %697 = vsyncpa %s696, 1
    %698 = vsyncpa [#allocation8], 1
    %699 = vsyncpa [#allocation6], 1
    %s700 = scalar_lea.sflag [#allocation6], 1
    %701 = vsyncpa %s700, 1
    %702 = vsyncpa [#allocation11], 1
    %s703 = scalar_lea.sflag [#allocation11], 1
    %704 = vsyncpa %s703, 1

</llo_original>
